<compile_context>
chip_gen: v5e
topology: v5e:2x2
jax: 0.10.0
libtpu: 0.0.40
codegen_flags: <defaults>
</compile_context>

<pallas_src>
import jax
import jax.numpy as jnp
from jax.experimental import pallas as pl
from jax.experimental.pallas import tpu as pltpu


def _round_up(a, m):
    return ((a + m - 1) // m) * m


# --- VMEM-aware batch-tile sizing --------------------------------------------
# Conservative per-sample VMEM upper bound (f32 compute path):
#   x tile double-buffered (2*128 B) + xt/h1/h1c/h2 temporaries (~4*128 B)
#   + output tile (8 B) + slack.
_VMEM_BYTES_PER_SAMPLE = 1152
_VMEM_TILE_BUDGET = 24 << 20        # keep scoped usage well under the limit below
_VMEM_LIMIT_BYTES = 48 << 20        # > v5e's 16 MiB scoped default, < v7x's 64 MiB physical
_DEFAULT_TILE_B = 16384             # big tiles amortize ~0.35 us per grid step


def _max_tile_b():
    return max(128, (_VMEM_TILE_BUDGET // _VMEM_BYTES_PER_SAMPLE) // 128 * 128)


def _dimension_semantics():
    # v7x has 2 TensorCores per chip: CORE_PARALLEL actually splits the batch
    # grid across them.  v5e/v6e expose one TensorCore -> plain "parallel".
    try:
        kind = jax.devices()[0].device_kind.lower()
    except Exception:
        kind = ""
    if "v7" in kind and hasattr(pltpu, "CORE_PARALLEL"):
        return (pltpu.CORE_PARALLEL,)
    return ("parallel",)


def schnapsen_kernel(x_ref, w1_ref, b1_ref, w2_ref, b2_ref, w3_ref, b3_ref, o_ref):
    """One batch tile.  x_ref: (tile_b, in_sz) straight from HBM.  Batch lives on
    the lane axis for every intermediate, so the (1, tile_b) output block is
    fully lane-dense."""
    # Cast + transpose in-kernel (replaces the old wrapper-side XLA pass).
    xt = x_ref[...].T.astype(w1_ref.dtype)                       # (in_sz, tile_b)

    # Layer 1: (hid, in) @ (in, tb) -> (hid, tb); f32 accumulation on the MXU.
    h1 = jnp.dot(w1_ref[...], xt, preferred_element_type=jnp.float32)
    h1 = jnp.maximum(h1 + b1_ref[...], 0.0)

    # Layer 2: hand off in the compute dtype (halves intermediate VMEM traffic
    # on v6e/v7x); accumulate in f32.
    h2 = jnp.dot(w2_ref[...], h1.astype(w2_ref.dtype),
                 preferred_element_type=jnp.float32)
    h2 = jnp.maximum(h2 + b2_ref[...], 0.0)

    # Layer 3 (out_features == 1): VPU broadcast-multiply + sublane reduction;
    # avoids a 1-wide MXU matmul wasting 127/128 result lanes.
    logits = jnp.sum(w3_ref[...] * h2, axis=0, keepdims=True) + b3_ref[...]

    o_ref[...] = jax.nn.sigmoid(logits)                           # (1, tile_b)


def schnapsen_forward(x, params, *, tile_b=None, compute_dtype=jnp.bfloat16):
    """x: (B, input_size) float32.  params in PyTorch layout:
       w1 (hid, in), b1 (hid,), w2 (hid, hid), b2 (hid,), w3 (1, hid), b3 (1,).
       Returns (B, 1) float32."""
    B, in_sz = x.shape
    hid = params["w1"].shape[0]

    # Batch tile: as large as the VMEM budget allows.  Ragged last blocks are
    # handled by Pallas (no padding / extra copy of x); grid = ceil(B / tb).
    want = _DEFAULT_TILE_B if tile_b is None else tile_b
    tb = max(128, _round_up(min(want, _round_up(B, 128)), 128))
    tb = min(tb, _max_tile_b())
    grid = (pl.cdiv(B, tb),)

    cdt = compute_dtype
    w1 = params["w1"].astype(cdt)                               # (hid, in_sz)
    w2 = params["w2"].astype(cdt)                               # (hid, hid)
    b1 = params["b1"].reshape(hid, 1).astype(jnp.float32)       # (hid, 1)
    b2 = params["b2"].reshape(hid, 1).astype(jnp.float32)       # (hid, 1)
    w3 = params["w3"].reshape(hid, 1).astype(jnp.float32)       # (hid, 1) column (VPU path)
    b3 = params["b3"].reshape(1, 1).astype(jnp.float32)         # (1, 1)

    weight_bytes = sum(int(a.size) * a.dtype.itemsize for a in (w1, w2, b1, b2, w3, b3))
    cost = pl.CostEstimate(
        flops=2 * B * (in_sz * hid + hid * hid + hid),
        transcendentals=B,                                      # one sigmoid exp / sample
        bytes_accessed=int(x.size) * x.dtype.itemsize + weight_bytes + B * 4,
    )

    out = pl.pallas_call(
        schnapsen_kernel,
        out_shape=jax.ShapeDtypeStruct((1, B), jnp.float32),
        grid_spec=pltpu.PrefetchScalarGridSpec(
            num_scalar_prefetch=0,
            grid=grid,
            in_specs=[
                pl.BlockSpec((tb, in_sz), lambda i: (i, 0)),    # x tile (no wrapper transpose)
                pl.BlockSpec((hid, in_sz), lambda i: (0, 0)),   # w1 (VMEM-resident)
                pl.BlockSpec((hid, 1), lambda i: (0, 0)),       # b1
                pl.BlockSpec((hid, hid), lambda i: (0, 0)),     # w2
                pl.BlockSpec((hid, 1), lambda i: (0, 0)),       # b2
                pl.BlockSpec((hid, 1), lambda i: (0, 0)),       # w3 column
                pl.BlockSpec((1, 1), lambda i: (0, 0)),         # b3
            ],
            out_specs=pl.BlockSpec((1, tb), lambda i: (0, i)),  # lane-dense output tile
        ),
        compiler_params=pltpu.CompilerParams(
            dimension_semantics=_dimension_semantics(),
            vmem_limit_bytes=_VMEM_LIMIT_BYTES,
        ),
        cost_estimate=cost,
    )(x, w1, b1, w2, b2, w3, b3)

    return out.reshape(B, 1)


def init_params(key, input_size, hidden_size):
    """PyTorch nn.Linear-style init (uniform +/- 1/sqrt(fan_in)), PyTorch layout."""
    ks = jax.random.split(key, 6)

    def lin(kw, kb, fan_in, fan_out):
        bound = 1.0 / jnp.sqrt(jnp.float32(fan_in))
        w = jax.random.uniform(kw, (fan_out, fan_in), jnp.float32, -bound, bound)
        b = jax.random.uniform(kb, (fan_out,), jnp.float32, -bound, bound)
        return w, b

    w1, b1 = lin(ks[0], ks[1], input_size, hidden_size)
    w2, b2 = lin(ks[2], ks[3], hidden_size, hidden_size)
    w3, b3 = lin(ks[4], ks[5], hidden_size, 1)
    return {"w1": w1, "b1": b1, "w2": w2, "b2": b2, "w3": w3, "b3": b3}


def reference_forward(x, p):
    """Pure-f32 PyTorch-semantics reference."""
    h1 = jnp.maximum(x @ p["w1"].T + p["b1"], 0.0)
    h2 = jnp.maximum(h1 @ p["w2"].T + p["b2"], 0.0)
    return jax.nn.sigmoid(h2 @ p["w3"].T + p["b3"])


def kernel_mirror_reference(x, p, compute_dtype):
    """Reference mirroring the kernel's mixed-precision casts exactly
    (compute-dtype matmul operands, f32 accumulation / elementwise / output)."""
    f32 = jnp.float32
    xc = x.astype(compute_dtype).astype(f32)
    w1 = p["w1"].astype(compute_dtype).astype(f32)
    w2 = p["w2"].astype(compute_dtype).astype(f32)
    h1 = jnp.maximum(xc @ w1.T + p["b1"], 0.0)
    h1 = h1.astype(compute_dtype).astype(f32)
    h2 = jnp.maximum(h1 @ w2.T + p["b2"], 0.0)
    logits = jnp.sum(h2 * p["w3"], axis=-1, keepdims=True) + p["b3"]
    return jax.nn.sigmoid(logits)


if __name__ == "__main__":
    key = jax.random.PRNGKey(0)
    k_x, k_p, k_x2, k_x3 = jax.random.split(key, 4)

    input_size = 32
    hidden_size = 32
    params = init_params(k_p, input_size, hidden_size)

    # Small batch: single (ragged) 128-wide lane tile, no padding anywhere.
    batch = 8
    x = jax.random.normal(k_x, (batch, input_size), jnp.float32)
    ref = reference_forward(x, params)

    # f32 compute path.
    out_f32 = jax.block_until_ready(schnapsen_forward(x, params, compute_dtype=jnp.float32))
    assert out_f32.shape == (batch, 1)
    assert jnp.allclose(out_f32, ref, atol=1e-2), "f32 path mismatch vs reference"

    # bf16 compute path (the optimized default): tight check vs matching-precision
    # reference, loose check vs the pure-f32 reference.
    out_bf16 = jax.block_until_ready(schnapsen_forward(x, params, compute_dtype=jnp.bfloat16))
    mirror = kernel_mirror_reference(x, params, jnp.bfloat16)
    assert out_bf16.shape == (batch, 1)
    assert jnp.allclose(out_bf16, mirror, atol=1e-4), "bf16 path mismatch vs matching-precision ref"
    assert jnp.allclose(out_bf16, ref, atol=3e-2), "bf16 path drifted too far from f32 reference"

    # Exactly-divisible multi-tile batch: 256 samples, tile_b=128 -> 2 grid steps.
    x3 = jax.random.normal(k_x3, (256, input_size), jnp.float32)
    out3 = jax.block_until_ready(
        schnapsen_forward(x3, params, tile_b=128, compute_dtype=jnp.bfloat16)
    )
    assert out3.shape == (256, 1)
    assert jnp.allclose(out3, kernel_mirror_reference(x3, params, jnp.bfloat16), atol=1e-4)

    # Ragged multi-tile batch: 300 samples, tile_b=128 -> 3 grid steps, last block
    # partial (no wrapper-side padding; OOB lanes are discarded by the [:B] slice).
    x2 = jax.random.normal(k_x2, (300, input_size), jnp.float32)
    out2 = jax.block_until_ready(
        schnapsen_forward(x2, params, tile_b=128, compute_dtype=jnp.bfloat16)
    )
    mirror2 = kernel_mirror_reference(x2, params, jnp.bfloat16)
    assert out2.shape == (300, 1)
    assert jnp.allclose(out2, mirror2, atol=1e-4), "ragged multi-tile batch mismatch"

    print("KERNEL_OK")
</pallas_src>

<mosaic_0001>
module attributes {stable_mosaic.version = 11 : i64} {
  func.func @schnapsen_kernel(%arg0: i32, %arg1: memref<128x32xf32, #tpu.memory_space<vmem>>, %arg2: memref<32x32xf32, #tpu.memory_space<vmem>>, %arg3: memref<32x1xf32, #tpu.memory_space<vmem>>, %arg4: memref<32x32xf32, #tpu.memory_space<vmem>>, %arg5: memref<32x1xf32, #tpu.memory_space<vmem>>, %arg6: memref<32x1xf32, #tpu.memory_space<vmem>>, %arg7: memref<1x1xf32, #tpu.memory_space<vmem>>, %arg8: memref<1x128xf32, #tpu.memory_space<vmem>>) attributes {dimension_semantics = [#tpu.dimension_semantics<parallel>], iteration_bounds = array<i64: 1>, scalar_prefetch = 0 : i64, scratch_operands = 0 : i64, tpu.core_type = #tpu.core_type<tc>, window_params = [{transform_indices = @transform_0, window_bounds = array<i64: 128, 32>}, {pipeline_mode = #tpu.pipeline_mode<synchronous>, transform_indices = @transform_1, window_bounds = array<i64: 32, 32>}, {pipeline_mode = #tpu.pipeline_mode<synchronous>, transform_indices = @transform_2, window_bounds = array<i64: 32, 1>}, {pipeline_mode = #tpu.pipeline_mode<synchronous>, transform_indices = @transform_3, window_bounds = array<i64: 32, 32>}, {pipeline_mode = #tpu.pipeline_mode<synchronous>, transform_indices = @transform_4, window_bounds = array<i64: 32, 1>}, {pipeline_mode = #tpu.pipeline_mode<synchronous>, transform_indices = @transform_5, window_bounds = array<i64: 32, 1>}, {pipeline_mode = #tpu.pipeline_mode<synchronous>, transform_indices = @transform_6, window_bounds = array<i64: 1, 1>}, {transform_indices = @transform_7, window_bounds = array<i64: 1, 128>}]} {
    %c0 = arith.constant 0 : index
    %c0_0 = arith.constant 0 : index
    %0 = vector.load %arg1[%c0, %c0_0] : memref<128x32xf32, #tpu.memory_space<vmem>>, vector<128x32xf32>
    %1 = tpu.transpose %0, [1, 0] : vector<128x32xf32> -> vector<32x128xf32>
    %c0_1 = arith.constant 0 : index
    %c0_2 = arith.constant 0 : index
    %2 = vector.load %arg2[%c0_1, %c0_2] : memref<32x32xf32, #tpu.memory_space<vmem>>, vector<32x32xf32>
    %cst = arith.constant dense<0.000000e+00> : vector<32x128xf32>
    %3 = tpu.matmul %2, %1, %cst {dimension_numbers = #tpu.dot_dimension_numbers<[1], [0], [0], [1], [0, 0, 1, 1], [], []>} : vector<32x32xf32>, vector<32x128xf32>, vector<32x128xf32> -> vector<32x128xf32>
    %c0_3 = arith.constant 0 : index
    %c0_4 = arith.constant 0 : index
    %4 = vector.load %arg3[%c0_3, %c0_4] : memref<32x1xf32, #tpu.memory_space<vmem>>, vector<32x1xf32>
    %5 = vector.broadcast %4 : vector<32x1xf32> to vector<32x128xf32>
    %6 = arith.addf %3, %5 : vector<32x128xf32>
    %cst_5 = arith.constant 0.000000e+00 : f32
    %7 = vector.broadcast %cst_5 : f32 to vector<32x128xf32>
    %8 = arith.maximumf %6, %7 : vector<32x128xf32>
    %c0_6 = arith.constant 0 : index
    %c0_7 = arith.constant 0 : index
    %9 = vector.load %arg4[%c0_6, %c0_7] : memref<32x32xf32, #tpu.memory_space<vmem>>, vector<32x32xf32>
    %cst_8 = arith.constant dense<0.000000e+00> : vector<32x128xf32>
    %10 = tpu.matmul %9, %8, %cst_8 {dimension_numbers = #tpu.dot_dimension_numbers<[1], [0], [0], [1], [0, 0, 1, 1], [], []>} : vector<32x32xf32>, vector<32x128xf32>, vector<32x128xf32> -> vector<32x128xf32>
    %c0_9 = arith.constant 0 : index
    %c0_10 = arith.constant 0 : index
    %11 = vector.load %arg5[%c0_9, %c0_10] : memref<32x1xf32, #tpu.memory_space<vmem>>, vector<32x1xf32>
    %12 = vector.broadcast %11 : vector<32x1xf32> to vector<32x128xf32>
    %13 = arith.addf %10, %12 : vector<32x128xf32>
    %cst_11 = arith.constant 0.000000e+00 : f32
    %14 = vector.broadcast %cst_11 : f32 to vector<32x128xf32>
    %15 = arith.maximumf %13, %14 : vector<32x128xf32>
    %c0_12 = arith.constant 0 : index
    %c0_13 = arith.constant 0 : index
    %16 = vector.load %arg6[%c0_12, %c0_13] : memref<32x1xf32, #tpu.memory_space<vmem>>, vector<32x1xf32>
    %17 = vector.broadcast %16 : vector<32x1xf32> to vector<32x128xf32>
    %18 = arith.mulf %17, %15 : vector<32x128xf32>
    %cst_14 = arith.constant dense<0.000000e+00> : vector<128xf32>
    %19 = vector.multi_reduction <add>, %18, %cst_14 [0] : vector<32x128xf32> to vector<128xf32>
    %20 = vector.shape_cast %19 : vector<128xf32> to vector<1x128xf32>
    %c0_15 = arith.constant 0 : index
    %c0_16 = arith.constant 0 : index
    %21 = vector.load %arg7[%c0_15, %c0_16] : memref<1x1xf32, #tpu.memory_space<vmem>>, vector<1x1xf32>
    %22 = vector.broadcast %21 : vector<1x1xf32> to vector<1x128xf32>
    %23 = arith.addf %20, %22 : vector<1x128xf32>
    %24 = arith.negf %23 : vector<1x128xf32>
    %25 = math.exp %24 : vector<1x128xf32>
    %cst_17 = arith.constant 1.000000e+00 : f32
    %26 = vector.broadcast %cst_17 : f32 to vector<1x128xf32>
    %27 = arith.addf %26, %25 : vector<1x128xf32>
    %28 = arith.divf %26, %27 : vector<1x128xf32>
    %c0_18 = arith.constant 0 : index
    %c0_19 = arith.constant 0 : index
    %29 = vector.load %arg8[%c0_18, %c0_19] : memref<1x128xf32, #tpu.memory_space<vmem>>, vector<1x128xf32>
    tpu.vector_store %arg8[%c0_18, %c0_19], %28 {strides = array<i32>} : memref<1x128xf32, #tpu.memory_space<vmem>>, vector<1x128xf32>,
    return
  }
  func.func @transform_0(%arg0: i32) -> (i32, i32) {
    %c0_i32 = arith.constant 0 : i32
    %c0_i32_0 = arith.constant 0 : i32
    return %arg0, %c0_i32 : i32, i32
  }
  func.func @transform_1(%arg0: i32) -> (i32, i32) {
    %c0_i32 = arith.constant 0 : i32
    %c0_i32_0 = arith.constant 0 : i32
    %c0_i32_1 = arith.constant 0 : i32
    return %c0_i32, %c0_i32_0 : i32, i32
  }
  func.func @transform_2(%arg0: i32) -> (i32, i32) {
    %c0_i32 = arith.constant 0 : i32
    %c0_i32_0 = arith.constant 0 : i32
    %c0_i32_1 = arith.constant 0 : i32
    return %c0_i32, %c0_i32_0 : i32, i32
  }
  func.func @transform_3(%arg0: i32) -> (i32, i32) {
    %c0_i32 = arith.constant 0 : i32
    %c0_i32_0 = arith.constant 0 : i32
    %c0_i32_1 = arith.constant 0 : i32
    return %c0_i32, %c0_i32_0 : i32, i32
  }
  func.func @transform_4(%arg0: i32) -> (i32, i32) {
    %c0_i32 = arith.constant 0 : i32
    %c0_i32_0 = arith.constant 0 : i32
    %c0_i32_1 = arith.constant 0 : i32
    return %c0_i32, %c0_i32_0 : i32, i32
  }
  func.func @transform_5(%arg0: i32) -> (i32, i32) {
    %c0_i32 = arith.constant 0 : i32
    %c0_i32_0 = arith.constant 0 : i32
    %c0_i32_1 = arith.constant 0 : i32
    return %c0_i32, %c0_i32_0 : i32, i32
  }
  func.func @transform_6(%arg0: i32) -> (i32, i32) {
    %c0_i32 = arith.constant 0 : i32
    %c0_i32_0 = arith.constant 0 : i32
    %c0_i32_1 = arith.constant 0 : i32
    return %c0_i32, %c0_i32_0 : i32, i32
  }
  func.func @transform_7(%arg0: i32) -> (i32, i32) {
    %c0_i32 = arith.constant 0 : i32
    %c0_i32_0 = arith.constant 0 : i32
    return %c0_i32, %arg0 : i32, i32
  }
}

</mosaic_0001>

<llo_original>
// kernel: tpu_custom_call.1
$region0: #{tpu_custom_call.1}
  #allocation0 [shape = 'u32[]', space=smem, size = 0x4, offset = 0x4, fixed_abs, tag = 'smem constant byte address 0x4 - core index']
  #allocation1 [shape = 'u32[72,128]{1,0:T(1,128)}', space=vmem, size = 0x9000, scoped, tag = 'internal scratch']
  #allocation2 [shape = 'f32[1,1]{1,0:T(1,128)S(1)}', space=vmem, size = 0x200, scoped, tag = 'scoped memory for tpu_custom_call.1']
  %s0 = inlined_call_operand.vmem [shape: f32[8,32], index: 0, kind: input, shape index: {}]
  %s1 = inlined_call_operand.vmem [shape: f32[32,32], index: 1, kind: input, shape index: {}]
  %s2 = inlined_call_operand.vmem [shape: f32[32,1], index: 2, kind: input, shape index: {}]
  %s3 = inlined_call_operand.vmem [shape: f32[32,32], index: 3, kind: input, shape index: {}]
  %s4 = inlined_call_operand.vmem [shape: f32[32,1], index: 4, kind: input, shape index: {}]
  %s5 = inlined_call_operand.vmem [shape: f32[32,1], index: 5, kind: input, shape index: {}]
  %s6 = inlined_call_operand.<no memory space> [shape: f32[1,1], index: 6, kind: input, shape index: {}]
  %s7 = inlined_call_operand.hbm [shape: f32[1,8], index: 7, kind: output, shape index: {}]
  %s8 = sld [smem:[#allocation0]]
  $region38: #{tpu_custom_call.1} parent=0
    _
  %s10 = ssub.s32 1, %s8
  %s11 = scalar_select 0, %s10, %s8
  %v12 = vstv %s6
  %13 = vst [vmem:[#allocation2] sm:$0x1] %v12
  $region1: #{tpu_custom_call.1} parent=0
    #allocation3 [shape = 'u8[512]{0}', space=vmem, size = 0x400, scoped, tag = 'output window, operand 0, single buffered']
    #allocation4 [shape = 's32[1]{0}', space=sflag, size = 0x4, scoped, tag = 'scoped memory for tpu_custom_call.1']
    %14 = vsyncpa [#allocation4], 0
    // Predicated region
    $region2: #{tpu_custom_call.1} parent=1 // pred_check
      _
    $region3: #{tpu_custom_call.1} parent=1 // pred_check_branch
      %16 = sbr.rel (0) target = $region5
    $region4: #{tpu_custom_call.1} parent=1 // pred_region
      _
    $region5: #{tpu_custom_call.1} parent=1 // pred_fallthru
      _
    // Predicated region
    $region6: #{tpu_custom_call.1} parent=1 // pred_check
      _
    $region7: #{tpu_custom_call.1} parent=1 // pred_check_branch
      %18 = sbr.rel (0) target = $region9
    $region8: #{tpu_custom_call.1} parent=1 // pred_region
      _
    $region9: #{tpu_custom_call.1} parent=1 // pred_fallthru
      _
    // Predicated region
    $region10: #{tpu_custom_call.1} parent=1 // pred_check
      _
    $region11: #{tpu_custom_call.1} parent=1 // pred_check_branch
      %20 = sbr.rel (0) target = $region13
    $region12: #{tpu_custom_call.1} parent=1 // pred_region
      _
    $region13: #{tpu_custom_call.1} parent=1 // pred_fallthru
      _
    // Predicated region
    $region14: #{tpu_custom_call.1} parent=1 // pred_check
      _
    $region15: #{tpu_custom_call.1} parent=1 // pred_check_branch
      %22 = sbr.rel (0) target = $region17
    $region16: #{tpu_custom_call.1} parent=1 // pred_region
      _
    $region17: #{tpu_custom_call.1} parent=1 // pred_fallthru
      _
    // Predicated region
    $region18: #{tpu_custom_call.1} parent=1 // pred_check
      _
    $region19: #{tpu_custom_call.1} parent=1 // pred_check_branch
      %24 = sbr.rel (0) target = $region21
    $region20: #{tpu_custom_call.1} parent=1 // pred_region
      _
    $region21: #{tpu_custom_call.1} parent=1 // pred_fallthru
      _
    // Predicated region
    $region22: #{tpu_custom_call.1} parent=1 // pred_check
      _
    $region23: #{tpu_custom_call.1} parent=1 // pred_check_branch
      %26 = sbr.rel (0) target = $region25
    $region24: #{tpu_custom_call.1} parent=1 // pred_region
      _
    $region25: #{tpu_custom_call.1} parent=1 // pred_fallthru
      _
    // Predicated region
    $region26: #{tpu_custom_call.1} parent=1 // pred_check
      _
    $region27: #{tpu_custom_call.1} parent=1 // pred_check_branch
      %28 = sbr.rel (0) target = $region29
    $region28: #{tpu_custom_call.1} parent=1 // pred_region
      _
    $region29: #{tpu_custom_call.1} parent=1 // pred_fallthru
      _
    %v29 = vld [vmem:[%s0] sm:$0xff]
    %v30 = vld [vmem:[%s0 + $0x8] sm:$0xff]
    %v31 = vld [vmem:[%s0 + $0x10] sm:$0xff]
    %v32 = vld [vmem:[%s0 + $0x18] sm:$0xff]
    %v33 = vld [vmem:[%s0 + $0x20] sm:$0xff]
    %v34 = vld [vmem:[%s0 + $0x28] sm:$0xff]
    %v35 = vld [vmem:[%s0 + $0x30] sm:$0xff]
    %v36 = vld [vmem:[%s0 + $0x38] sm:$0xff]
    %v37 = vld [vmem:[%s0 + $0x40] sm:$0xff]
    %v38 = vld [vmem:[%s0 + $0x48] sm:$0xff]
    %v39 = vld [vmem:[%s0 + $0x50] sm:$0xff]
    %v40 = vld [vmem:[%s0 + $0x58] sm:$0xff]
    %v41 = vld [vmem:[%s0 + $0x60] sm:$0xff]
    %v42 = vld [vmem:[%s0 + $0x68] sm:$0xff]
    %v43 = vld [vmem:[%s0 + $0x70] sm:$0xff]
    %v44 = vld [vmem:[%s0 + $0x78] sm:$0xff]
    %v45 = vld [vmem:[%s1] sm:$0xff]
    %v46 = vld [vmem:[%s1 + $0x8] sm:$0xff]
    %v47 = vld [vmem:[%s1 + $0x10] sm:$0xff]
    %v48 = vld [vmem:[%s1 + $0x18] sm:$0xff]
    %v49 = vld [vmem:[%s2] sm:$0xff]
    %v50 = vld [vmem:[%s2 + $0x8] sm:$0xff]
    %v51 = vld [vmem:[%s2 + $0x10] sm:$0xff]
    %v52 = vld [vmem:[%s2 + $0x18] sm:$0xff]
    %54 = vset.pattern.permute.xlu0 0
    %55 = vperm.xlu0 %54, %v49
    %v56 = vpop.permute.xlu0 %55
    %59 = vset.pattern.permute.xlu0 0
    %60 = vperm.xlu0 %59, %v50
    %v61 = vpop.permute.xlu0 %60
    %64 = vset.pattern.permute.xlu0 0
    %65 = vperm.xlu0 %64, %v51
    %v66 = vpop.permute.xlu0 %65
    %69 = vset.pattern.permute.xlu0 0
    %70 = vperm.xlu0 %69, %v52
    %v71 = vpop.permute.xlu0 %70
    %vm73 = vcmask 261120
    %v75 = vsel %vm73, %v45, 0
    %v78 = vsel %vm73, %v46, 0
    %v81 = vsel %vm73, %v47, 0
    %v84 = vsel %vm73, %v48, 0
    %v87 = vsel %vm73, %v29, 0
    %v90 = vsel %vm73, %v30, 0
    %v93 = vsel %vm73, %v31, 0
    %v96 = vsel %vm73, %v32, 0
    %v99 = vsel %vm73, %v33, 0
    %v102 = vsel %vm73, %v34, 0
    %v105 = vsel %vm73, %v35, 0
    %v108 = vsel %vm73, %v36, 0
    %v111 = vsel %vm73, %v37, 0
    %v114 = vsel %vm73, %v38, 0
    %v117 = vsel %vm73, %v39, 0
    %v120 = vsel %vm73, %v40, 0
    %v123 = vsel %vm73, %v41, 0
    %v126 = vsel %vm73, %v42, 0
    %v129 = vsel %vm73, %v43, 0
    %v132 = vsel %vm73, %v44, 0
    %134 = vmatpush.xpose.msra.mxu0 %v132
    %135 = vmatpush.xpose.msra.mxu0 %v129
    %136 = vmatpush.xpose.msra.mxu0 %v126
    %137 = vmatpush.xpose.msra.mxu0 %v123
    %138 = vmatpush.xpose.msra.mxu0 %v120
    %139 = vmatpush.xpose.msra.mxu0 %v117
    %140 = vmatpush.xpose.msra.mxu0 %v114
    %141 = vmatpush.xpose.msra.mxu0 %v111
    %142 = vmatpush.xpose.msra.mxu0 %v108
    %143 = vmatpush.xpose.msra.mxu0 %v105
    %144 = vmatpush.xpose.msra.mxu0 %v102
    %145 = vmatpush.xpose.msra.mxu0 %v99
    %146 = vmatpush.xpose.msra.mxu0 %v96
    %147 = vmatpush.xpose.msra.mxu0 %v93
    %148 = vmatpush.xpose.msra.mxu0 %v90
    %149 = vmatpush.xpose.msra.mxu0 %v87
    %150 = vmatmul.f32.gmra.mxu0 %v75
    %v151 = vpop.f32.mrf.mxu0
    %v152 = vadd.f32 %v56, %v151
    %153 = vmatmul.f32.gmra.mxu0 %v78
    %v154 = vpop.f32.mrf.mxu0
    %v155 = vadd.f32 %v61, %v154
    %156 = vmatmul.f32.gmra.mxu0 %v81
    %v157 = vpop.f32.mrf.mxu0
    %v158 = vadd.f32 %v66, %v157
    %159 = vmatmul.f32.gmra.mxu0 %v84
    %v160 = vpop.f32.mrf.mxu0
    %v161 = vadd.f32 %v71, %v160
    %162 = vdwg.mxu0
    %v163 = vmax.f32 %v152, 0.0
    %v164 = vmax.f32 %v155, 0.0
    %v165 = vmax.f32 %v158, 0.0
    %v166 = vmax.f32 %v161, 0.0
    %v167 = vld [vmem:[%s3] sm:$0xff]
    %v168 = vld [vmem:[%s3 + $0x8] sm:$0xff]
    %v169 = vld [vmem:[%s3 + $0x10] sm:$0xff]
    %v170 = vld [vmem:[%s3 + $0x18] sm:$0xff]
    %v171 = vld [vmem:[%s4] sm:$0xff]
    %v172 = vld [vmem:[%s4 + $0x8] sm:$0xff]
    %v173 = vld [vmem:[%s4 + $0x10] sm:$0xff]
    %v174 = vld [vmem:[%s4 + $0x18] sm:$0xff]
    %176 = vset.pattern.permute.xlu0 0
    %177 = vperm.xlu0 %176, %v171
    %v178 = vpop.permute.xlu0 %177
    %181 = vset.pattern.permute.xlu0 0
    %182 = vperm.xlu0 %181, %v172
    %v183 = vpop.permute.xlu0 %182
    %186 = vset.pattern.permute.xlu0 0
    %187 = vperm.xlu0 %186, %v173
    %v188 = vpop.permute.xlu0 %187
    %191 = vset.pattern.permute.xlu0 0
    %192 = vperm.xlu0 %191, %v174
    %v193 = vpop.permute.xlu0 %192
    %v196 = vsel %vm73, %v167, 0
    %v199 = vsel %vm73, %v168, 0
    %v202 = vsel %vm73, %v169, 0
    %v205 = vsel %vm73, %v170, 0
    %207 = vmatpush.msra.mxu0 0.0
    %208 = vmatpush.msra.mxu0 0.0
    %209 = vmatpush.msra.mxu0 0.0
    %210 = vmatpush.msra.mxu0 0.0
    %211 = vmatpush.msra.mxu0 0.0
    %212 = vmatpush.msra.mxu0 0.0
    %213 = vmatpush.msra.mxu0 0.0
    %214 = vmatpush.msra.mxu0 0.0
    %215 = vmatpush.msra.mxu0 0.0
    %216 = vmatpush.msra.mxu0 0.0
    %217 = vmatpush.msra.mxu0 0.0
    %218 = vmatpush.msra.mxu0 0.0
    %219 = vmatpush.msra.mxu0 %v166
    %220 = vmatpush.msra.mxu0 %v165
    %221 = vmatpush.msra.mxu0 %v164
    %222 = vmatpush.msra.mxu0 %v163
    %223 = vmatmul.f32.gmra.mxu0 %v196
    %v224 = vpop.f32.mrf.mxu0
    %v225 = vadd.f32 %v178, %v224
    %226 = vmatmul.f32.gmra.mxu0 %v199
    %v227 = vpop.f32.mrf.mxu0
    %v228 = vadd.f32 %v183, %v227
    %229 = vmatmul.f32.gmra.mxu0 %v202
    %v230 = vpop.f32.mrf.mxu0
    %v231 = vadd.f32 %v188, %v230
    %232 = vmatmul.f32.gmra.mxu0 %v205
    %v233 = vpop.f32.mrf.mxu0
    %v234 = vadd.f32 %v193, %v233
    %235 = vdwg.mxu0
    %v236 = vmax.f32 %v225, 0.0
    %v237 = vmax.f32 %v228, 0.0
    %v238 = vmax.f32 %v231, 0.0
    %v239 = vmax.f32 %v234, 0.0
    %v240 = vld [vmem:[%s5] sm:$0xff]
    %v241 = vld [vmem:[%s5 + $0x8] sm:$0xff]
    %v242 = vld [vmem:[%s5 + $0x10] sm:$0xff]
    %v243 = vld [vmem:[%s5 + $0x18] sm:$0xff]
    %245 = vset.pattern.permute.xlu0 0
    %246 = vperm.xlu0 %245, %v240
    %v247 = vpop.permute.xlu0 %246
    %250 = vset.pattern.permute.xlu0 0
    %251 = vperm.xlu0 %250, %v241
    %v252 = vpop.permute.xlu0 %251
    %255 = vset.pattern.permute.xlu0 0
    %256 = vperm.xlu0 %255, %v242
    %v257 = vpop.permute.xlu0 %256
    %260 = vset.pattern.permute.xlu0 0
    %261 = vperm.xlu0 %260, %v243
    %v262 = vpop.permute.xlu0 %261
    %v264 = vmul.f32 %v247, %v236
    %v265 = vmul.f32 %v252, %v237
    %v266 = vmul.f32 %v257, %v238
    %v267 = vmul.f32 %v262, %v239
    %v268 = vadd.f32 %v264, %v265
    %v269 = vadd.f32 %v268, %v266
    %v270 = vadd.f32 %v269, %v267
    %v271 = vrot.slane %v270, 4
    %v272 = vadd.f32 %v270, %v271
    %v273 = vrot.slane %v272, 2
    %v274 = vadd.f32 %v272, %v273
    %v275 = vrot.slane %v274, 1
    %v276 = vadd.f32 %v274, %v275
    %v277 = vld [vmem:[#allocation2] sm:$0x1]
    %279 = vset.pattern.permute.xlu0 0
    %280 = vperm.xlu0 %279, %v277
    %v281 = vpop.permute.xlu0 %280
    %v283 = vperm.slane %v281, 0
    %v284 = vadd.f32 %v276, %v283
    %v285 = vxor.u32 %v284, 2147483648
    %v286 = vmul.f32 %v285, 1.442695
    %v287 = vpow.pop %v286
    %v288 = vadd.f32 %v287, 1.0
    %v289 = vrcp.pop %v288
    %v290 = vmul.f32 %v288, %v289
    %v291 = vsub.f32 1.0, %v290
    %v292 = vmul.f32 %v289, %v291
    %v293 = vadd.f32 %v289, %v292
    %vm294 = vweird.f32 %v288
    %vm295 = vweird.f32 %v289
    %vm296 = vmor %vm294, %vm295
    %v297 = vsel %vm296, %v289, %v293
    %v298 = vand.u32 2147483647, %v288
    %vm299 = vcmp.eq.f32.partialorder %v298, 8.507059e+37
    %v300 = vand.u32 %v288, 2147483648
    %v301 = vor.u32 1.1754944e-38, %v300
    %v302 = vsel %vm299, %v301, %v297
    %v303 = vmul.f32 1.0, %v302
    %304 = vst [vmem:[#allocation3] sm:$0x1] %v303
    // Predicated region
    $region30: #{tpu_custom_call.1} parent=1 // pred_check
      _
    $region31: #{tpu_custom_call.1} parent=1 // pred_check_branch
      %306 = sbr.rel (0) target = $region33
    $region32: #{tpu_custom_call.1} parent=1 // pred_region
      %308 = vsyncadd [#allocation4], 0
      %s310 = sshll.u32 [#allocation3], 4
      %s311 = int_to_ptr.vmem [resolvable:$true] %s310
      %s312 = sshll.u32 %s7, 4
      %s313 = int_to_ptr.hbm [resolvable:$true] %s312
      %315 = dma.vmem_to_hbm [thread:$0]  %s311, 16, %s313, [#allocation4]
    $region33: #{tpu_custom_call.1} parent=1 // pred_fallthru
      _
    // Predicated region
    $region34: #{tpu_custom_call.1} parent=1 // pred_check
      _
    $region35: #{tpu_custom_call.1} parent=1 // pred_check_branch
      %317 = sbr.rel (0) target = $region37
    $region36: #{tpu_custom_call.1} parent=1 // pred_region
      %319 = dma.done [#allocation4], 16
    $region37: #{tpu_custom_call.1} parent=1 // pred_fallthru
      _
    %320 = vsyncpa [#allocation4], 1

</llo_original>
